<compile_context>
chip_gen: v6e
topology: v6e:2x2x1
jax: 0.10.0
libtpu: 0.0.40
codegen_flags: <defaults>
</compile_context>

<pallas_src>
import jax
import jax.numpy as jnp
from jax.experimental import pallas as pl
from jax.experimental.pallas import tpu as pltpu

IN_FEATURES = 4
OUT_FEATURES = 64


def _round_up(a, b):
    return ((a + b - 1) // b) * b


def _linear_argmax_kernel(xt_ref, w_ref, out_ref):
    # xt_ref : (K, TB) f32 activations, batch on lanes
    # w_ref  : (N, K)  f32 weight (torch Linear layout)
    # out_ref: (1, TB) i32 argmax indices (lane-dense row)
    xt = xt_ref[...].astype(jnp.float32)      # (K, TB)
    w = w_ref[...].astype(jnp.float32)        # (N, K)
    n, k_dim = w.shape

    # y[n, b] = sum_k w[n, k] * x[b, k] — K=4 unrolled VPU broadcast FMAs:
    # (N,1) lane-broadcast * (1,TB) sublane-broadcast -> (N, TB).
    y = w[:, 0:1] * xt[0:1, :]
    for k in range(1, k_dim):
        y = y + w[:, k:k + 1] * xt[k:k + 1, :]

    # argmax over the N (sublane) axis, first-occurrence tie-break like torch.argmax.
    row = jax.lax.broadcasted_iota(jnp.int32, y.shape, 0)        # (N, TB)
    maxv = jnp.max(y, axis=0, keepdims=True)                     # (1, TB)
    idx = jnp.min(jnp.where(y == maxv, row, jnp.int32(n)),
                  axis=0, keepdims=True)                         # (1, TB)
    out_ref[...] = idx.astype(jnp.int32)


def linear_argmax(x, w, tb=None, use_pallas=None):
    """x: (B, IN), w: (OUT, IN) torch-Linear layout. Returns (B,) int32 = argmax(x @ w.T, axis=1)."""
    B, K = x.shape
    N, K2 = w.shape
    assert K == K2

    # TODO(synk): torch.argmax returns int64; we return int32 (identical indices, TPU-friendly).

    if use_pallas is None:
        # At tiny batches the kernel is pure launch/pipeline-prologue overhead;
        # let XLA fuse matmul+argmax into one trivial fusion.
        use_pallas = B >= 1024
    if not use_pallas:
        y = x.astype(jnp.float32) @ w.astype(jnp.float32).T
        return jnp.argmax(y, axis=1).astype(jnp.int32)

    cap = 4096
    if tb is None:
        b128 = _round_up(B, 128)
        # Aim for >=2 grid programs (v7x has 2 TensorCores) whenever B allows it.
        tb = min(cap, max(128, _round_up(pl.cdiv(b128, 2), 128)))
    tb = max(128, _round_up(tb, 128))
    Bp = _round_up(B, tb)
    grid = (Bp // tb,)

    # Batch-on-lanes: (K, Bp) activations. Padded batch columns are zeros
    # (their argmax is 0) and get sliced off below.
    xt = x.T
    if Bp != B:
        xt = jnp.pad(xt, ((0, 0), (0, Bp - B)))

    cost = pl.CostEstimate(
        flops=2 * Bp * K * N,
        transcendentals=0,
        bytes_accessed=(Bp * K + N * K) * 4 + Bp * 4,
    )

    out = pl.pallas_call(
        _linear_argmax_kernel,
        out_shape=jax.ShapeDtypeStruct((1, Bp), jnp.int32),
        grid=grid,
        in_specs=[
            pl.BlockSpec((K, tb), lambda i: (0, i)),   # lane-dense batch tile of x^T
            pl.BlockSpec((N, K), lambda i: (0, 0)),    # full (64,4) weight, resident
        ],
        out_specs=pl.BlockSpec((1, tb), lambda i: (0, i)),  # lane-dense index row
        compiler_params=pltpu.CompilerParams(
            dimension_semantics=("parallel",),
        ),
        cost_estimate=cost,
    )(xt, w)

    # keepdim=False -> (B,) ; drop batch padding.
    return out[0, :B]


def reference_linear_argmax(x, w):
    y = x.astype(jnp.float32) @ w.astype(jnp.float32).T
    return jnp.argmax(y, axis=1).astype(jnp.int32)


if __name__ == "__main__":
    key = jax.random.PRNGKey(0)
    kx, kw = jax.random.split(key)

    # Deterministic Linear weight (torch layout [OUT, IN]), no bias.
    w = jax.random.normal(kw, (OUT_FEATURES, IN_FEATURES), dtype=jnp.float32) * 0.1

    # 1) Small batch matching the module's forward, forced through the Pallas path.
    B = 8
    x = jax.random.normal(kx, (B, IN_FEATURES), dtype=jnp.float32)
    out = jax.block_until_ready(linear_argmax(x, w, use_pallas=True))
    ref = reference_linear_argmax(x, w)
    assert out.shape == (B,), out.shape
    assert jnp.array_equal(out, ref), (out, ref)

    # 2) Auto path (tiny batch -> plain XLA fusion) gives the same answer.
    out_auto = jax.block_until_ready(linear_argmax(x, w))
    assert jnp.array_equal(out_auto, ref), (out_auto, ref)

    # 3) Larger batch: multi-tile grid (default tb=256 -> grid=(2,)) with batch padding.
    kx2 = jax.random.fold_in(kx, 1)
    B2 = 300
    x2 = jax.random.normal(kx2, (B2, IN_FEATURES), dtype=jnp.float32)
    out2 = jax.block_until_ready(linear_argmax(x2, w, use_pallas=True))
    ref2 = reference_linear_argmax(x2, w)
    assert out2.shape == (B2,), out2.shape
    assert jnp.array_equal(out2, ref2), (out2, ref2)

    print("KERNEL_OK")
</pallas_src>

<mosaic_0001>
module attributes {stable_mosaic.version = 11 : i64} {
  func.func @_linear_argmax_kernel(%arg0: i32, %arg1: memref<4x128xf32, #tpu.memory_space<vmem>>, %arg2: memref<64x4xf32, #tpu.memory_space<vmem>>, %arg3: memref<1x128xi32, #tpu.memory_space<vmem>>) attributes {dimension_semantics = [#tpu.dimension_semantics<parallel>], iteration_bounds = array<i64: 1>, scalar_prefetch = 0 : i64, scratch_operands = 0 : i64, tpu.core_type = #tpu.core_type<tc>, window_params = [{transform_indices = @transform_0, window_bounds = array<i64: 4, 128>}, {pipeline_mode = #tpu.pipeline_mode<synchronous>, transform_indices = @transform_1, window_bounds = array<i64: 64, 4>}, {transform_indices = @transform_2, window_bounds = array<i64: 1, 128>}]} {
    %c0 = arith.constant 0 : index
    %c0_0 = arith.constant 0 : index
    %0 = vector.load %arg1[%c0, %c0_0] : memref<4x128xf32, #tpu.memory_space<vmem>>, vector<4x128xf32>
    %c0_1 = arith.constant 0 : index
    %c0_2 = arith.constant 0 : index
    %1 = vector.load %arg2[%c0_1, %c0_2] : memref<64x4xf32, #tpu.memory_space<vmem>>, vector<64x4xf32>
    %2 = vector.extract_strided_slice %1 {offsets = [0, 0], sizes = [64, 1], strides = [1, 1]} : vector<64x4xf32> to vector<64x1xf32>
    %3 = vector.extract_strided_slice %0 {offsets = [0, 0], sizes = [1, 128], strides = [1, 1]} : vector<4x128xf32> to vector<1x128xf32>
    %4 = vector.broadcast %2 : vector<64x1xf32> to vector<64x128xf32>
    %5 = vector.broadcast %3 : vector<1x128xf32> to vector<64x128xf32>
    %6 = arith.mulf %4, %5 : vector<64x128xf32>
    %7 = vector.extract_strided_slice %1 {offsets = [0, 1], sizes = [64, 1], strides = [1, 1]} : vector<64x4xf32> to vector<64x1xf32>
    %8 = vector.extract_strided_slice %0 {offsets = [1, 0], sizes = [1, 128], strides = [1, 1]} : vector<4x128xf32> to vector<1x128xf32>
    %9 = vector.broadcast %7 : vector<64x1xf32> to vector<64x128xf32>
    %10 = vector.broadcast %8 : vector<1x128xf32> to vector<64x128xf32>
    %11 = arith.mulf %9, %10 : vector<64x128xf32>
    %12 = arith.addf %6, %11 : vector<64x128xf32>
    %13 = vector.extract_strided_slice %1 {offsets = [0, 2], sizes = [64, 1], strides = [1, 1]} : vector<64x4xf32> to vector<64x1xf32>
    %14 = vector.extract_strided_slice %0 {offsets = [2, 0], sizes = [1, 128], strides = [1, 1]} : vector<4x128xf32> to vector<1x128xf32>
    %15 = vector.broadcast %13 : vector<64x1xf32> to vector<64x128xf32>
    %16 = vector.broadcast %14 : vector<1x128xf32> to vector<64x128xf32>
    %17 = arith.mulf %15, %16 : vector<64x128xf32>
    %18 = arith.addf %12, %17 : vector<64x128xf32>
    %19 = vector.extract_strided_slice %1 {offsets = [0, 3], sizes = [64, 1], strides = [1, 1]} : vector<64x4xf32> to vector<64x1xf32>
    %20 = vector.extract_strided_slice %0 {offsets = [3, 0], sizes = [1, 128], strides = [1, 1]} : vector<4x128xf32> to vector<1x128xf32>
    %21 = vector.broadcast %19 : vector<64x1xf32> to vector<64x128xf32>
    %22 = vector.broadcast %20 : vector<1x128xf32> to vector<64x128xf32>
    %23 = arith.mulf %21, %22 : vector<64x128xf32>
    %24 = arith.addf %18, %23 : vector<64x128xf32>
    %25 = tpu.iota {dimensions = array<i32: 0>} : vector<64x128xi32>
    %cst = arith.constant dense<0xFF800000> : vector<128xf32>
    %26 = vector.multi_reduction <maximumf>, %24, %cst [0] : vector<64x128xf32> to vector<128xf32>
    %27 = vector.shape_cast %26 : vector<128xf32> to vector<1x128xf32>
    %28 = vector.broadcast %27 : vector<1x128xf32> to vector<64x128xf32>
    %29 = arith.cmpf oeq, %24, %28 : vector<64x128xf32>
    %c64_i32 = arith.constant 64 : i32
    %30 = vector.broadcast %c64_i32 : i32 to vector<64x128xi32>
    %31 = arith.select %29, %25, %30 : vector<64x128xi1>, vector<64x128xi32>
    %cst_3 = arith.constant dense<2147483647> : vector<128xi32>
    %32 = vector.multi_reduction <minsi>, %31, %cst_3 [0] : vector<64x128xi32> to vector<128xi32>
    %33 = vector.shape_cast %32 : vector<128xi32> to vector<1x128xi32>
    %c0_4 = arith.constant 0 : index
    %c0_5 = arith.constant 0 : index
    %34 = vector.load %arg3[%c0_4, %c0_5] : memref<1x128xi32, #tpu.memory_space<vmem>>, vector<1x128xi32>
    tpu.vector_store %arg3[%c0_4, %c0_5], %33 {strides = array<i32>} : memref<1x128xi32, #tpu.memory_space<vmem>>, vector<1x128xi32>,
    return
  }
  func.func @transform_0(%arg0: i32) -> (i32, i32) {
    %c0_i32 = arith.constant 0 : i32
    %c0_i32_0 = arith.constant 0 : i32
    return %c0_i32, %arg0 : i32, i32
  }
  func.func @transform_1(%arg0: i32) -> (i32, i32) {
    %c0_i32 = arith.constant 0 : i32
    %c0_i32_0 = arith.constant 0 : i32
    %c0_i32_1 = arith.constant 0 : i32
    return %c0_i32, %c0_i32_0 : i32, i32
  }
  func.func @transform_2(%arg0: i32) -> (i32, i32) {
    %c0_i32 = arith.constant 0 : i32
    %c0_i32_0 = arith.constant 0 : i32
    return %c0_i32, %arg0 : i32, i32
  }
}

</mosaic_0001>

<llo_original>
// kernel: tpu_custom_call.1
$region0: #{tpu_custom_call.1}
  #allocation0 [shape = 'u32[]', space=smem, size = 0x4, offset = 0x4, fixed_abs, tag = 'smem constant byte address 0x4 - core index']
  #allocation1 [shape = 'u32[144,128]{1,0:T(1,128)}', space=vmem, size = 0x12000, scoped, tag = 'internal scratch']
  %s0 = inlined_call_operand.vmem [shape: f32[4,128], index: 0, kind: input, shape index: {}]
  %s1 = inlined_call_operand.vmem [shape: f32[64,4], index: 1, kind: input, shape index: {}]
  %s2 = inlined_call_operand.hbm [shape: s32[1,128], index: 2, kind: output, shape index: {}]
  %s3 = sld [smem:[#allocation0]]
  $region18: #{tpu_custom_call.1} parent=0
    _
  %s5 = ssub.s32 1, %s3
  %s6 = scalar_select 0, %s5, %s3
  $region1: #{tpu_custom_call.1} parent=0
    #allocation2 [shape = 'u8[512]{0}', space=vmem, size = 0x400, scoped, tag = 'output window, operand 0, single buffered']
    #allocation3 [shape = 's32[1]{0}', space=sflag, size = 0x4, scoped, tag = 'scoped memory for tpu_custom_call.1']
    %7 = vsyncpa [#allocation3], 0
    // Predicated region
    $region2: #{tpu_custom_call.1} parent=1 // pred_check
      _
    $region3: #{tpu_custom_call.1} parent=1 // pred_check_branch
      %9 = sbr.rel (0) target = $region5
    $region4: #{tpu_custom_call.1} parent=1 // pred_region
      _
    $region5: #{tpu_custom_call.1} parent=1 // pred_fallthru
      _
    // Predicated region
    $region6: #{tpu_custom_call.1} parent=1 // pred_check
      _
    $region7: #{tpu_custom_call.1} parent=1 // pred_check_branch
      %11 = sbr.rel (0) target = $region9
    $region8: #{tpu_custom_call.1} parent=1 // pred_region
      _
    $region9: #{tpu_custom_call.1} parent=1 // pred_fallthru
      _
    %v12 = vld [vmem:[%s0] sm:$0xf]
    %v13 = vld [vmem:[%s1] sm:$0xff]
    %v14 = vld [vmem:[%s1 + $0x8] sm:$0xff]
    %v15 = vld [vmem:[%s1 + $0x10] sm:$0xff]
    %v16 = vld [vmem:[%s1 + $0x18] sm:$0xff]
    %v17 = vld [vmem:[%s1 + $0x20] sm:$0xff]
    %v18 = vld [vmem:[%s1 + $0x28] sm:$0xff]
    %v19 = vld [vmem:[%s1 + $0x30] sm:$0xff]
    %v20 = vld [vmem:[%s1 + $0x38] sm:$0xff]
    %22 = vset.pattern.permute.xlu0 0
    %23 = vperm.xlu0 %22, %v13
    %v24 = vpop.permute.xlu0 %23
    %27 = vset.pattern.permute.xlu0 0
    %28 = vperm.xlu0 %27, %v14
    %v29 = vpop.permute.xlu0 %28
    %32 = vset.pattern.permute.xlu0 0
    %33 = vperm.xlu0 %32, %v15
    %v34 = vpop.permute.xlu0 %33
    %37 = vset.pattern.permute.xlu0 0
    %38 = vperm.xlu0 %37, %v16
    %v39 = vpop.permute.xlu0 %38
    %42 = vset.pattern.permute.xlu0 0
    %43 = vperm.xlu0 %42, %v17
    %v44 = vpop.permute.xlu0 %43
    %47 = vset.pattern.permute.xlu0 0
    %48 = vperm.xlu0 %47, %v18
    %v49 = vpop.permute.xlu0 %48
    %52 = vset.pattern.permute.xlu0 0
    %53 = vperm.xlu0 %52, %v19
    %v54 = vpop.permute.xlu0 %53
    %57 = vset.pattern.permute.xlu0 0
    %58 = vperm.xlu0 %57, %v20
    %v59 = vpop.permute.xlu0 %58
    %v61 = vlaneseq
    %v62 = vshrl.u32 %v61, 7
    %v63 = vsub.s32 0, %v62
    %v64 = vrot.slane %v12, %v63
    %v65 = vmul.f32 %v24, %v64
    %v66 = vmul.f32 %v29, %v64
    %v67 = vmul.f32 %v34, %v64
    %v68 = vmul.f32 %v39, %v64
    %v69 = vmul.f32 %v44, %v64
    %v70 = vmul.f32 %v49, %v64
    %v71 = vmul.f32 %v54, %v64
    %v72 = vmul.f32 %v59, %v64
    %73 = vset.pattern.permute.xlu0 1
    %74 = vperm.xlu0 %73, %v13
    %v75 = vpop.permute.xlu0 %74
    %77 = vset.pattern.permute.xlu0 1
    %78 = vperm.xlu0 %77, %v14
    %v79 = vpop.permute.xlu0 %78
    %81 = vset.pattern.permute.xlu0 1
    %82 = vperm.xlu0 %81, %v15
    %v83 = vpop.permute.xlu0 %82
    %85 = vset.pattern.permute.xlu0 1
    %86 = vperm.xlu0 %85, %v16
    %v87 = vpop.permute.xlu0 %86
    %89 = vset.pattern.permute.xlu0 1
    %90 = vperm.xlu0 %89, %v17
    %v91 = vpop.permute.xlu0 %90
    %93 = vset.pattern.permute.xlu0 1
    %94 = vperm.xlu0 %93, %v18
    %v95 = vpop.permute.xlu0 %94
    %97 = vset.pattern.permute.xlu0 1
    %98 = vperm.xlu0 %97, %v19
    %v99 = vpop.permute.xlu0 %98
    %101 = vset.pattern.permute.xlu0 1
    %102 = vperm.xlu0 %101, %v20
    %v103 = vpop.permute.xlu0 %102
    %v105 = vlaneseq
    %v106 = vshrl.u32 %v105, 7
    %v107 = vsub.s32 1, %v106
    %v108 = vrot.slane %v12, %v107
    %v109 = vmul.f32 %v75, %v108
    %v110 = vmul.f32 %v79, %v108
    %v111 = vmul.f32 %v83, %v108
    %v112 = vmul.f32 %v87, %v108
    %v113 = vmul.f32 %v91, %v108
    %v114 = vmul.f32 %v95, %v108
    %v115 = vmul.f32 %v99, %v108
    %v116 = vmul.f32 %v103, %v108
    %v117 = vadd.f32 %v65, %v109
    %v118 = vadd.f32 %v66, %v110
    %v119 = vadd.f32 %v67, %v111
    %v120 = vadd.f32 %v68, %v112
    %v121 = vadd.f32 %v69, %v113
    %v122 = vadd.f32 %v70, %v114
    %v123 = vadd.f32 %v71, %v115
    %v124 = vadd.f32 %v72, %v116
    %125 = vset.pattern.permute.xlu0 2
    %126 = vperm.xlu0 %125, %v13
    %v127 = vpop.permute.xlu0 %126
    %129 = vset.pattern.permute.xlu0 2
    %130 = vperm.xlu0 %129, %v14
    %v131 = vpop.permute.xlu0 %130
    %133 = vset.pattern.permute.xlu0 2
    %134 = vperm.xlu0 %133, %v15
    %v135 = vpop.permute.xlu0 %134
    %137 = vset.pattern.permute.xlu0 2
    %138 = vperm.xlu0 %137, %v16
    %v139 = vpop.permute.xlu0 %138
    %141 = vset.pattern.permute.xlu0 2
    %142 = vperm.xlu0 %141, %v17
    %v143 = vpop.permute.xlu0 %142
    %145 = vset.pattern.permute.xlu0 2
    %146 = vperm.xlu0 %145, %v18
    %v147 = vpop.permute.xlu0 %146
    %149 = vset.pattern.permute.xlu0 2
    %150 = vperm.xlu0 %149, %v19
    %v151 = vpop.permute.xlu0 %150
    %153 = vset.pattern.permute.xlu0 2
    %154 = vperm.xlu0 %153, %v20
    %v155 = vpop.permute.xlu0 %154
    %v157 = vlaneseq
    %v158 = vshrl.u32 %v157, 7
    %v159 = vsub.s32 2, %v158
    %v160 = vrot.slane %v12, %v159
    %v161 = vmul.f32 %v127, %v160
    %v162 = vmul.f32 %v131, %v160
    %v163 = vmul.f32 %v135, %v160
    %v164 = vmul.f32 %v139, %v160
    %v165 = vmul.f32 %v143, %v160
    %v166 = vmul.f32 %v147, %v160
    %v167 = vmul.f32 %v151, %v160
    %v168 = vmul.f32 %v155, %v160
    %v169 = vadd.f32 %v117, %v161
    %v170 = vadd.f32 %v118, %v162
    %v171 = vadd.f32 %v119, %v163
    %v172 = vadd.f32 %v120, %v164
    %v173 = vadd.f32 %v121, %v165
    %v174 = vadd.f32 %v122, %v166
    %v175 = vadd.f32 %v123, %v167
    %v176 = vadd.f32 %v124, %v168
    %177 = vset.pattern.permute.xlu0 3
    %178 = vperm.xlu0 %177, %v13
    %v179 = vpop.permute.xlu0 %178
    %181 = vset.pattern.permute.xlu0 3
    %182 = vperm.xlu0 %181, %v14
    %v183 = vpop.permute.xlu0 %182
    %185 = vset.pattern.permute.xlu0 3
    %186 = vperm.xlu0 %185, %v15
    %v187 = vpop.permute.xlu0 %186
    %189 = vset.pattern.permute.xlu0 3
    %190 = vperm.xlu0 %189, %v16
    %v191 = vpop.permute.xlu0 %190
    %193 = vset.pattern.permute.xlu0 3
    %194 = vperm.xlu0 %193, %v17
    %v195 = vpop.permute.xlu0 %194
    %197 = vset.pattern.permute.xlu0 3
    %198 = vperm.xlu0 %197, %v18
    %v199 = vpop.permute.xlu0 %198
    %201 = vset.pattern.permute.xlu0 3
    %202 = vperm.xlu0 %201, %v19
    %v203 = vpop.permute.xlu0 %202
    %205 = vset.pattern.permute.xlu0 3
    %206 = vperm.xlu0 %205, %v20
    %v207 = vpop.permute.xlu0 %206
    %v209 = vlaneseq
    %v210 = vshrl.u32 %v209, 7
    %v211 = vsub.s32 3, %v210
    %v212 = vrot.slane %v12, %v211
    %v213 = vmul.f32 %v179, %v212
    %v214 = vmul.f32 %v183, %v212
    %v215 = vmul.f32 %v187, %v212
    %v216 = vmul.f32 %v191, %v212
    %v217 = vmul.f32 %v195, %v212
    %v218 = vmul.f32 %v199, %v212
    %v219 = vmul.f32 %v203, %v212
    %v220 = vmul.f32 %v207, %v212
    %v221 = vadd.f32 %v169, %v213
    %v222 = vadd.f32 %v170, %v214
    %v223 = vadd.f32 %v171, %v215
    %v224 = vadd.f32 %v172, %v216
    %v225 = vadd.f32 %v173, %v217
    %v226 = vadd.f32 %v174, %v218
    %v227 = vadd.f32 %v175, %v219
    %v228 = vadd.f32 %v176, %v220
    %v229 = vlaneseq
    %v230 = vshrl.u32 %v229, 7
    %v231 = vadd.s32 %v230, 8
    %v232 = vadd.s32 %v230, 16
    %v233 = vadd.s32 %v230, 24
    %v234 = vadd.s32 %v230, 32
    %v235 = vadd.s32 %v230, 40
    %v236 = vadd.s32 %v230, 48
    %v237 = vadd.s32 %v230, 56
    %v238 = vmax.f32 %v221, %v225
    %v239 = vmax.f32 %v222, %v226
    %v240 = vmax.f32 %v223, %v227
    %v241 = vmax.f32 %v224, %v228
    %v242 = vmax.f32 %v238, %v239
    %v243 = vmax.f32 %v240, %v241
    %v244 = vmax.f32 %v242, %v243
    %v245 = vrot.slane %v244, 4
    %v246 = vmax.f32 %v244, %v245
    %v247 = vrot.slane %v246, 2
    %v248 = vmax.f32 %v246, %v247
    %v249 = vrot.slane %v248, 1
    %v250 = vmax.f32 %v248, %v249
    %vm251 = vcmp.eq.f32.partialorder %v221, %v250
    %vm252 = vcmp.eq.f32.partialorder %v222, %v250
    %vm253 = vcmp.eq.f32.partialorder %v223, %v250
    %vm254 = vcmp.eq.f32.partialorder %v224, %v250
    %vm255 = vcmp.eq.f32.partialorder %v225, %v250
    %vm256 = vcmp.eq.f32.partialorder %v226, %v250
    %vm257 = vcmp.eq.f32.partialorder %v227, %v250
    %vm258 = vcmp.eq.f32.partialorder %v228, %v250
    %v259 = vsel %vm251, %v230, 64
    %v260 = vsel %vm252, %v231, 64
    %v261 = vsel %vm253, %v232, 64
    %v262 = vsel %vm254, %v233, 64
    %v263 = vsel %vm255, %v234, 64
    %v264 = vsel %vm256, %v235, 64
    %v265 = vsel %vm257, %v236, 64
    %v266 = vsel %vm258, %v237, 64
    %vm267 = vcmp.lt.s32.totalorder %v259, %v263
    %v268 = vsel %vm267, %v259, %v263
    %vm269 = vcmp.lt.s32.totalorder %v260, %v264
    %v270 = vsel %vm269, %v260, %v264
    %vm271 = vcmp.lt.s32.totalorder %v261, %v265
    %v272 = vsel %vm271, %v261, %v265
    %vm273 = vcmp.lt.s32.totalorder %v262, %v266
    %v274 = vsel %vm273, %v262, %v266
    %vm275 = vcmp.lt.s32.totalorder %v268, %v270
    %v276 = vsel %vm275, %v268, %v270
    %vm277 = vcmp.lt.s32.totalorder %v272, %v274
    %v278 = vsel %vm277, %v272, %v274
    %vm279 = vcmp.lt.s32.totalorder %v276, %v278
    %v280 = vsel %vm279, %v276, %v278
    %v281 = vrot.slane %v280, 4
    %vm282 = vcmp.lt.s32.totalorder %v280, %v281
    %v283 = vsel %vm282, %v280, %v281
    %v284 = vrot.slane %v283, 2
    %vm285 = vcmp.lt.s32.totalorder %v283, %v284
    %v286 = vsel %vm285, %v283, %v284
    %v287 = vrot.slane %v286, 1
    %vm288 = vcmp.lt.s32.totalorder %v286, %v287
    %v289 = vsel %vm288, %v286, %v287
    %290 = vst [vmem:[#allocation2] sm:$0x1] %v289
    // Predicated region
    $region10: #{tpu_custom_call.1} parent=1 // pred_check
      _
    $region11: #{tpu_custom_call.1} parent=1 // pred_check_branch
      %292 = sbr.rel (0) target = $region13
    $region12: #{tpu_custom_call.1} parent=1 // pred_region
      %s294 = ssub.s32 16, 16
      %295 = vsyncadd [#allocation3], %s294
      %s297 = sshll.u32 [#allocation2], 4
      %s298 = int_to_ptr.vmem [resolvable:$true] %s297
      %300 = dma.vmem_to_hbm [thread:$0]  %s298, 16, %s2, [#allocation3]
    $region13: #{tpu_custom_call.1} parent=1 // pred_fallthru
      _
    // Predicated region
    $region14: #{tpu_custom_call.1} parent=1 // pred_check
      _
    $region15: #{tpu_custom_call.1} parent=1 // pred_check_branch
      %302 = sbr.rel (0) target = $region17
    $region16: #{tpu_custom_call.1} parent=1 // pred_region
      %303 = dma.done [#allocation3], 16
    $region17: #{tpu_custom_call.1} parent=1 // pred_fallthru
      _
    %304 = vsyncpa [#allocation3], 1

</llo_original>
